<compile_context>
chip_gen: v7x
topology: tpu7x:2x2x1
jax: 0.10.0
libtpu: 0.0.40
codegen_flags: <defaults>
</compile_context>

<pallas_src>
import functools
import math

import jax
import jax.numpy as jnp
from jax.experimental import pallas as pl
from jax.experimental.pallas import tpu as pltpu

EPS = 1e-5
NEG_SLOPE = 0.2


def _round_up(x, m):
    return ((x + m - 1) // m) * m


def _pad2(a, rows, cols):
    return jnp.pad(a, ((0, rows - a.shape[0]), (0, cols - a.shape[1])))


# --------------------------------------------------------------------------
# Capability probe: single-buffering of constant-index resident blocks.
# --------------------------------------------------------------------------
@functools.lru_cache(maxsize=1)
def _buffered_one_supported():
    """True iff pl.BlockSpec(..., pipeline_mode=pl.Buffered(1)) compiles & runs."""
    try:
        spec = pl.BlockSpec((8, 128), lambda i: (0, 0),
                            pipeline_mode=pl.Buffered(1))
    except Exception:
        return False
    try:
        def _k(x_ref, o_ref):
            o_ref[...] = x_ref[...] * 2.0

        x = jnp.zeros((8, 128), jnp.float32)
        out = pl.pallas_call(
            _k,
            out_shape=jax.ShapeDtypeStruct((8, 128), jnp.float32),
            grid=(1,),
            in_specs=[spec],
            out_specs=pl.BlockSpec((8, 128), lambda i: (0, 0)),
        )(x)
        jax.block_until_ready(out)
        return True
    except Exception:
        return False


def _vmem_budget_bytes():
    """Per-generation VMEM budget with ~15% headroom for compiler scratch."""
    try:
        cap = int(pltpu.get_tpu_info().vmem_capacity_bytes)
    except Exception:
        cap = 64 << 20  # conservative fallback (v7x per-core capacity)
    return int(cap * 0.85)


# --------------------------------------------------------------------------
# Kernel
# --------------------------------------------------------------------------
def _bn_lrelu(h, gamma, beta, inv_n):
    """Training-mode BatchNorm1d (batch stats over the real rows; padded rows
    are exactly zero) folded into one scale/shift, followed by LeakyReLU(0.2).
    Single reduction pass: var = E[x^2] - mean^2, clamped at 0."""
    s1 = jnp.sum(h, axis=0, keepdims=True)
    s2 = jnp.sum(h * h, axis=0, keepdims=True)
    mean = s1 * inv_n
    var = jnp.maximum(s2 * inv_n - mean * mean, 0.0)
    scale = gamma * jax.lax.rsqrt(var + EPS)
    shift = beta - mean * scale
    h = h * scale + shift
    return jnp.where(h > 0, h, NEG_SLOPE * h)


def generator_kernel(x_ref, w1_ref, g1_ref, be1_ref,
                     w2_ref, g2_ref, be2_ref,
                     w3_ref, b3_ref,
                     o_ref, h_ref, *, n_valid):
    b_pad = x_ref.shape[0]
    inv_n = 1.0 / n_valid  # divide batch stats by the *real* batch size

    # ---- backbone, hoisted: runs once per core (tile index 0) -------------
    @pl.when(pl.program_id(1) == 0)
    def _backbone():
        # fused (noise | one-hot) @ [W1_noise ; E@W1_emb]  (biases cancelled
        # by training-mode BN).  Padded batch rows are all-zero.
        h = jnp.dot(x_ref[...], w1_ref[...],
                    preferred_element_type=jnp.float32)
        h = _bn_lrelu(h, g1_ref[...], be1_ref[...], inv_n)

        # Re-zero padded batch rows (BN shift made them non-zero) so the next
        # layer's batch statistics stay exact.  Static no-op when B == B_pad.
        if n_valid != b_pad:
            row_mask = (jax.lax.broadcasted_iota(jnp.int32, (b_pad, 1), 0)
                        < n_valid)
            h = jnp.where(row_mask, h, 0.0)

        # fc2 -> bn2 -> LeakyReLU (bias cancelled by BN)
        h = jnp.dot(h.astype(w2_ref.dtype), w2_ref[...],
                    preferred_element_type=jnp.float32)
        h = _bn_lrelu(h, g2_ref[...], be2_ref[...], inv_n)
        h_ref[...] = h.astype(h_ref.dtype)

    # ---- per-tile fc3 + tanh (lane-dense output tile) ----------------------
    y = jnp.dot(h_ref[...], w3_ref[...],
                preferred_element_type=jnp.float32) + b3_ref[...]
    o_ref[...] = jnp.tanh(y)


# --------------------------------------------------------------------------
# Parameter preparation (done once, outside the per-call path)
# --------------------------------------------------------------------------
def prepare_params(params, *, matmul_dtype=jnp.bfloat16):
    """Fold E @ W1_emb into fc1, stack [W1_noise ; E@W1_emb] into one padded
    contraction, drop fc1/fc2 biases (exactly cancelled by training-mode BN),
    zero-pad every feature dim to a multiple of 128, pre-cast matmul operands."""
    emb = params["emb"]
    w1 = params["w1"]
    num_classes = emb.shape[0]
    noise_size = w1.shape[0] - num_classes
    hidden = w1.shape[1]
    out_dim = params["w3"].shape[1]

    k_pad = _round_up(noise_size, 128)
    c_pad = _round_up(num_classes, 128)
    h_pad = _round_up(hidden, 128)
    n_pad = _round_up(out_dim, 128)

    ew1 = emb @ w1[noise_size:]                       # (classes, hidden)
    w1_full = jnp.zeros((k_pad + c_pad, h_pad), jnp.float32)
    w1_full = w1_full.at[:noise_size, :hidden].set(w1[:noise_size])
    w1_full = w1_full.at[k_pad:k_pad + num_classes, :hidden].set(ew1)

    return dict(
        w1=w1_full.astype(matmul_dtype),
        g1=_pad2(params["g1"], 1, h_pad),
        be1=_pad2(params["be1"], 1, h_pad),
        w2=_pad2(params["w2"], h_pad, h_pad).astype(matmul_dtype),
        g2=_pad2(params["g2"], 1, h_pad),
        be2=_pad2(params["be2"], 1, h_pad),
        w3=_pad2(params["w3"], h_pad, n_pad).astype(matmul_dtype),
        b3=_pad2(params["b3"], 1, n_pad),
    )


# --------------------------------------------------------------------------
# Forward wrapper
# --------------------------------------------------------------------------
def generator_forward(noise, labels, kp, *, img_size, out_channels):
    B, noise_size = noise.shape
    k_in_pad, h_pad = kp["w1"].shape
    n_pad = kp["w3"].shape[1]
    out_dim = img_size * img_size * out_channels
    mm_dtype = kp["w1"].dtype
    mm_bytes = mm_dtype.itemsize

    k_pad = _round_up(noise_size, 128)
    c_pad = k_in_pad - k_pad

    # bf16 vregs pack 16 sublanes -> pad batch to 16 for bf16, else 8.
    b_mult = 16 if mm_dtype == jnp.bfloat16 else 8
    b_pad = _round_up(max(B, b_mult), b_mult)

    # Fused concat([noise, one_hot]) built host-side (lane-dense; both halves
    # 128-aligned).  Padded batch rows stay exactly zero -> BN stats (divided
    # by the real B in-kernel) are exact.
    one_hot = jax.nn.one_hot(labels, c_pad, dtype=mm_dtype)
    x_p = jnp.zeros((b_pad, k_in_pad), mm_dtype)
    x_p = x_p.at[:B, :noise_size].set(noise.astype(mm_dtype))
    x_p = x_p.at[:B, k_pad:].set(one_hot)

    has_buf1 = _buffered_one_supported()
    budget = _vmem_budget_bytes()

    resident_bufs = 1 if has_buf1 else 2
    resident_bytes = resident_bufs * (
        b_pad * k_in_pad * mm_bytes          # x
        + k_in_pad * h_pad * mm_bytes        # w1 (stacked)
        + h_pad * h_pad * mm_bytes           # w2
        + 4 * h_pad * 4)                     # g1/be1/g2/be2

    def est_bytes(t):
        tiled = 2 * (h_pad * t * mm_bytes    # w3 tile (double-buffered)
                     + t * 4                 # b3 tile
                     + b_pad * t * 4)        # out tile
        scratch = b_pad * h_pad * mm_bytes   # persistent h
        interm = 4 * b_pad * h_pad * 4 + 2 * b_pad * t * 4  # h, h*h, BN, y
        return resident_bytes + tiled + scratch + interm + (2 << 20)

    # Largest lane-dense tile that divides n_pad, fits the budget, and leaves
    # >= 2 tiles when n_pad >= 256 (so the parallel axis can shard across both
    # v7x TensorCores).
    cands = [t for t in (2048, 1024, 512, 256, 128)
             if n_pad % t == 0 and (n_pad < 256 or t <= n_pad // 2)]
    tile_n = cands[-1]
    for t in cands:
        if est_bytes(t) <= budget:
            tile_n = t
            break
    nt = n_pad // tile_n
    n_split = 2 if nt % 2 == 0 else 1        # leading "parallel" core axis
    tiles_per_split = nt // n_split

    vmem_limit = int(min(max(est_bytes(tile_n), 32 << 20), budget))

    def resident(shape):
        im = lambda c, j, _n=len(shape): (0,) * _n
        if has_buf1:
            return pl.BlockSpec(shape, im, pipeline_mode=pl.Buffered(1))
        return pl.BlockSpec(shape, im)

    col = lambda c, j: (0, c * tiles_per_split + j)

    args = (x_p, kp["w1"], kp["g1"], kp["be1"],
            kp["w2"], kp["g2"], kp["be2"],
            kp["w3"], kp["b3"])
    in_specs = ([resident(a.shape) for a in args[:-2]]
                + [pl.BlockSpec((h_pad, tile_n), col),   # w3 tile (streamed)
                   pl.BlockSpec((1, tile_n), col)])      # b3 tile
    out_spec = pl.BlockSpec((b_pad, tile_n), col)

    flat = pl.pallas_call(
        functools.partial(generator_kernel, n_valid=B),
        out_shape=jax.ShapeDtypeStruct((b_pad, n_pad), jnp.float32),
        grid=(n_split, tiles_per_split),
        in_specs=in_specs,
        out_specs=out_spec,
        scratch_shapes=[pltpu.VMEM((b_pad, h_pad), mm_dtype)],
        compiler_params=pltpu.CompilerParams(
            dimension_semantics=("parallel", "arbitrary"),
            vmem_limit_bytes=vmem_limit),
    )(*args)

    return flat[:B, :out_dim].reshape(B, out_channels, img_size, img_size)


# --------------------------------------------------------------------------
# Synthetic parameters + pure-JAX reference (PyTorch semantics, f32)
# --------------------------------------------------------------------------
def init_params(key, *, img_size, noise_size, num_classes, num_hiddens,
                out_channels):
    """Deterministic synthetic parameters matching the PyTorch module shapes.
    Linear weights are stored transposed, i.e. (in, out).  Biases and BN
    affine params are non-trivial so the BN-bias-cancellation is exercised."""
    in_dim = noise_size + num_classes
    out_dim = img_size * img_size * out_channels
    ks = jax.random.split(key, 10)

    def lin_w(k, fi, fo):
        s = 1.0 / math.sqrt(fi)
        return jax.random.uniform(k, (fi, fo), jnp.float32, -s, s)

    def lin_b(k, fi, fo):
        s = 1.0 / math.sqrt(fi)
        return jax.random.uniform(k, (1, fo), jnp.float32, -s, s)

    return dict(
        emb=jax.random.normal(ks[0], (num_classes, num_classes), jnp.float32),
        w1=lin_w(ks[1], in_dim, num_hiddens),
        b1=lin_b(ks[2], in_dim, num_hiddens),
        g1=1.0 + 0.1 * jax.random.normal(ks[3], (1, num_hiddens), jnp.float32),
        be1=0.1 * jax.random.normal(ks[4], (1, num_hiddens), jnp.float32),
        w2=lin_w(ks[5], num_hiddens, num_hiddens),
        b2=lin_b(ks[6], num_hiddens, num_hiddens),
        g2=1.0 + 0.1 * jax.random.normal(ks[7], (1, num_hiddens), jnp.float32),
        be2=0.1 * jax.random.normal(ks[8], (1, num_hiddens), jnp.float32),
        w3=lin_w(ks[9], num_hiddens, out_dim),
        b3=lin_b(ks[0], num_hiddens, out_dim),
    )


def reference_forward(noise, labels, params, *, img_size, out_channels):
    """Pure-JAX f32 reference with exact PyTorch training-mode semantics."""
    emb = jnp.take(params["emb"], labels, axis=0)
    x = jnp.concatenate([noise, emb], axis=1)

    def bn_lrelu(h, g, b):
        m = jnp.mean(h, axis=0, keepdims=True)
        v = jnp.mean((h - m) ** 2, axis=0, keepdims=True)
        h = (h - m) / jnp.sqrt(v + EPS) * g + b
        return jnp.where(h > 0, h, NEG_SLOPE * h)

    h = bn_lrelu(x @ params["w1"] + params["b1"], params["g1"], params["be1"])
    h = bn_lrelu(h @ params["w2"] + params["b2"], params["g2"], params["be2"])
    y = jnp.tanh(h @ params["w3"] + params["b3"])
    return y.reshape(-1, out_channels, img_size, img_size)


# --------------------------------------------------------------------------
if __name__ == "__main__":
    # Small, module-consistent shapes.  batch=6 deliberately not a multiple of
    # 8/16 to exercise the batch padding + masked-BN path; out_dim=256 gives
    # two output tiles so the (parallel, arbitrary) grid is exercised.
    img_size = 16
    noise_size = 24
    num_classes = 8
    num_hiddens = 128
    out_channels = 1
    batch = 6

    key = jax.random.PRNGKey(0)
    k_param, k_noise, k_label = jax.random.split(key, 3)

    params = init_params(
        k_param, img_size=img_size, noise_size=noise_size,
        num_classes=num_classes, num_hiddens=num_hiddens,
        out_channels=out_channels)

    noise = jax.random.normal(k_noise, (batch, noise_size), jnp.float32)
    labels = jax.random.randint(k_label, (batch,), 0, num_classes, jnp.int32)

    ref = reference_forward(
        noise, labels, params, img_size=img_size, out_channels=out_channels)

    _buffered_one_supported()   # run capability probe eagerly, outside jit

    fwd = jax.jit(functools.partial(
        generator_forward, img_size=img_size, out_channels=out_channels))

    # (matmul operand dtype, tolerance vs f32 reference)
    for mm_dtype, tol in ((jnp.float32, 2e-3), (jnp.bfloat16, 3e-2)):
        kparams = prepare_params(params, matmul_dtype=mm_dtype)
        out = jax.block_until_ready(fwd(noise, labels, kparams))
        assert out.shape == (batch, out_channels, img_size, img_size), out.shape
        err = float(jnp.max(jnp.abs(out - ref)))
        assert err < tol, f"dtype={mm_dtype}, max abs err {err} >= {tol}"

    print("KERNEL_OK")
</pallas_src>

<mosaic_0001>
module attributes {stable_mosaic.version = 11 : i64} {
  func.func @_k(%arg0: i32, %arg1: memref<8x128xf32, #tpu.memory_space<vmem>>, %arg2: memref<8x128xf32, #tpu.memory_space<vmem>>) attributes {dimension_semantics = [#tpu.dimension_semantics<arbitrary>], iteration_bounds = array<i64: 1>, scalar_prefetch = 0 : i64, scratch_operands = 0 : i64, tpu.core_type = #tpu.core_type<tc>, window_params = [{pipeline_mode = #tpu.pipeline_mode<synchronous>, transform_indices = @transform_0, window_bounds = array<i64: 8, 128>}, {pipeline_mode = #tpu.pipeline_mode<synchronous>, transform_indices = @transform_1, window_bounds = array<i64: 8, 128>}]} {
    %c0 = arith.constant 0 : index
    %c0_0 = arith.constant 0 : index
    %0 = vector.load %arg1[%c0, %c0_0] : memref<8x128xf32, #tpu.memory_space<vmem>>, vector<8x128xf32>
    %cst = arith.constant 2.000000e+00 : f32
    %1 = vector.broadcast %cst : f32 to vector<8x128xf32>
    %2 = arith.mulf %0, %1 : vector<8x128xf32>
    %c0_1 = arith.constant 0 : index
    %c0_2 = arith.constant 0 : index
    %3 = vector.load %arg2[%c0_1, %c0_2] : memref<8x128xf32, #tpu.memory_space<vmem>>, vector<8x128xf32>
    tpu.vector_store %arg2[%c0_1, %c0_2], %2 {strides = array<i32>} : memref<8x128xf32, #tpu.memory_space<vmem>>, vector<8x128xf32>,
    return
  }
  func.func @transform_0(%arg0: i32) -> (i32, i32) {
    %c0_i32 = arith.constant 0 : i32
    %c0_i32_0 = arith.constant 0 : i32
    %c0_i32_1 = arith.constant 0 : i32
    return %c0_i32, %c0_i32_0 : i32, i32
  }
  func.func @transform_1(%arg0: i32) -> (i32, i32) {
    %c0_i32 = arith.constant 0 : i32
    %c0_i32_0 = arith.constant 0 : i32
    %c0_i32_1 = arith.constant 0 : i32
    return %c0_i32, %c0_i32_0 : i32, i32
  }
}

module attributes {stable_mosaic.version = 11 : i64} {
  func.func @generator_kernel(%arg0: i32, %arg1: i32, %arg2: memref<8x256xf32, #tpu.memory_space<vmem>>, %arg3: memref<256x128xf32, #tpu.memory_space<vmem>>, %arg4: memref<1x128xf32, #tpu.memory_space<vmem>>, %arg5: memref<1x128xf32, #tpu.memory_space<vmem>>, %arg6: memref<128x128xf32, #tpu.memory_space<vmem>>, %arg7: memref<1x128xf32, #tpu.memory_space<vmem>>, %arg8: memref<1x128xf32, #tpu.memory_space<vmem>>, %arg9: memref<128x128xf32, #tpu.memory_space<vmem>>, %arg10: memref<1x128xf32, #tpu.memory_space<vmem>>, %arg11: memref<8x128xf32, #tpu.memory_space<vmem>>, %arg12: memref<8x128xf32, #tpu.memory_space<vmem>>) attributes {dimension_semantics = [#tpu.dimension_semantics<parallel>, #tpu.dimension_semantics<arbitrary>], iteration_bounds = array<i64: 2, 1>, scalar_prefetch = 0 : i64, scratch_operands = 1 : i64, tpu.core_type = #tpu.core_type<tc>, window_params = [{pipeline_mode = #tpu.pipeline_mode<synchronous>, transform_indices = @transform_0, window_bounds = array<i64: 8, 256>}, {pipeline_mode = #tpu.pipeline_mode<synchronous>, transform_indices = @transform_1, window_bounds = array<i64: 256, 128>}, {pipeline_mode = #tpu.pipeline_mode<synchronous>, transform_indices = @transform_2, window_bounds = array<i64: 1, 128>}, {pipeline_mode = #tpu.pipeline_mode<synchronous>, transform_indices = @transform_3, window_bounds = array<i64: 1, 128>}, {pipeline_mode = #tpu.pipeline_mode<synchronous>, transform_indices = @transform_4, window_bounds = array<i64: 128, 128>}, {pipeline_mode = #tpu.pipeline_mode<synchronous>, transform_indices = @transform_5, window_bounds = array<i64: 1, 128>}, {pipeline_mode = #tpu.pipeline_mode<synchronous>, transform_indices = @transform_6, window_bounds = array<i64: 1, 128>}, {transform_indices = @transform_7, window_bounds = array<i64: 128, 128>}, {transform_indices = @transform_8, window_bounds = array<i64: 1, 128>}, {transform_indices = @transform_9, window_bounds = array<i64: 8, 128>}]} {
    %c0_i32 = arith.constant 0 : i32
    %0 = arith.cmpi eq, %arg1, %c0_i32 : i32
    %1 = arith.extui %0 : i1 to i32
    %c0_i32_0 = arith.constant 0 : i32
    %2 = arith.cmpi ne, %1, %c0_i32_0 : i32
    scf.if %2 {
      %c0_8 = arith.constant 0 : index
      %c0_9 = arith.constant 0 : index
      %11 = vector.load %arg2[%c0_8, %c0_9] : memref<8x256xf32, #tpu.memory_space<vmem>>, vector<8x256xf32>
      %c0_10 = arith.constant 0 : index
      %c0_11 = arith.constant 0 : index
      %12 = vector.load %arg3[%c0_10, %c0_11] : memref<256x128xf32, #tpu.memory_space<vmem>>, vector<256x128xf32>
      %cst_12 = arith.constant dense<0.000000e+00> : vector<8x128xf32>
      %13 = tpu.matmul %11, %12, %cst_12 {dimension_numbers = #tpu.dot_dimension_numbers<[1], [0], [0], [1], [0, 0, 1, 1], [], []>} : vector<8x256xf32>, vector<256x128xf32>, vector<8x128xf32> -> vector<8x128xf32>
      %c0_13 = arith.constant 0 : index
      %c0_14 = arith.constant 0 : index
      %14 = vector.load %arg4[%c0_13, %c0_14] : memref<1x128xf32, #tpu.memory_space<vmem>>, vector<1x128xf32>
      %c0_15 = arith.constant 0 : index
      %c0_16 = arith.constant 0 : index
      %15 = vector.load %arg5[%c0_15, %c0_16] : memref<1x128xf32, #tpu.memory_space<vmem>>, vector<1x128xf32>
      %cst_17 = arith.constant dense<0.000000e+00> : vector<128xf32>
      %16 = vector.multi_reduction <add>, %13, %cst_17 [0] : vector<8x128xf32> to vector<128xf32>
      %17 = vector.shape_cast %16 : vector<128xf32> to vector<1x128xf32>
      %18 = arith.mulf %13, %13 : vector<8x128xf32>
      %cst_18 = arith.constant dense<0.000000e+00> : vector<128xf32>
      %19 = vector.multi_reduction <add>, %18, %cst_18 [0] : vector<8x128xf32> to vector<128xf32>
      %20 = vector.shape_cast %19 : vector<128xf32> to vector<1x128xf32>
      %cst_19 = arith.constant 0.166666672 : f32
      %21 = vector.broadcast %cst_19 : f32 to vector<1x128xf32>
      %22 = arith.mulf %17, %21 : vector<1x128xf32>
      %cst_20 = arith.constant 0.166666672 : f32
      %23 = vector.broadcast %cst_20 : f32 to vector<1x128xf32>
      %24 = arith.mulf %20, %23 : vector<1x128xf32>
      %25 = arith.mulf %22, %22 : vector<1x128xf32>
      %26 = arith.subf %24, %25 : vector<1x128xf32>
      %cst_21 = arith.constant 0.000000e+00 : f32
      %27 = vector.broadcast %cst_21 : f32 to vector<1x128xf32>
      %28 = arith.maximumf %26, %27 : vector<1x128xf32>
      %cst_22 = arith.constant 9.99999974E-6 : f32
      %29 = vector.broadcast %cst_22 : f32 to vector<1x128xf32>
      %30 = arith.addf %28, %29 : vector<1x128xf32>
      %31 = math.rsqrt %30 : vector<1x128xf32>
      %32 = arith.mulf %14, %31 : vector<1x128xf32>
      %33 = arith.mulf %22, %32 : vector<1x128xf32>
      %34 = arith.subf %15, %33 : vector<1x128xf32>
      %35 = vector.broadcast %32 : vector<1x128xf32> to vector<8x128xf32>
      %36 = arith.mulf %13, %35 : vector<8x128xf32>
      %37 = vector.broadcast %34 : vector<1x128xf32> to vector<8x128xf32>
      %38 = arith.addf %36, %37 : vector<8x128xf32>
      %cst_23 = arith.constant 0.000000e+00 : f32
      %39 = vector.broadcast %cst_23 : f32 to vector<8x128xf32>
      %40 = arith.cmpf ogt, %38, %39 : vector<8x128xf32>
      %cst_24 = arith.constant 2.000000e-01 : f32
      %41 = vector.broadcast %cst_24 : f32 to vector<8x128xf32>
      %42 = arith.mulf %41, %38 : vector<8x128xf32>
      %43 = arith.select %40, %38, %42 : vector<8x128xi1>, vector<8x128xf32>
      %44 = tpu.iota {dimensions = array<i32: 0>} : vector<8x1xi32>
      %c6_i32 = arith.constant 6 : i32
      %45 = vector.broadcast %c6_i32 : i32 to vector<8x1xi32>
      %46 = arith.cmpi slt, %44, %45 : vector<8x1xi32>
      %cst_25 = arith.constant 0.000000e+00 : f32
      %47 = vector.shape_cast %46 : vector<8x1xi1> to vector<8x1xi1>
      %48 = vector.broadcast %47 : vector<8x1xi1> to vector<8x128xi1>
      %49 = vector.broadcast %cst_25 : f32 to vector<8x128xf32>
      %50 = arith.select %48, %43, %49 : vector<8x128xi1>, vector<8x128xf32>
      %c0_26 = arith.constant 0 : index
      %c0_27 = arith.constant 0 : index
      %51 = vector.load %arg6[%c0_26, %c0_27] : memref<128x128xf32, #tpu.memory_space<vmem>>, vector<128x128xf32>
      %cst_28 = arith.constant dense<0.000000e+00> : vector<8x128xf32>
      %52 = tpu.matmul %50, %51, %cst_28 {dimension_numbers = #tpu.dot_dimension_numbers<[1], [0], [0], [1], [0, 0, 1, 1], [], []>} : vector<8x128xf32>, vector<128x128xf32>, vector<8x128xf32> -> vector<8x128xf32>
      %c0_29 = arith.constant 0 : index
      %c0_30 = arith.constant 0 : index
      %53 = vector.load %arg7[%c0_29, %c0_30] : memref<1x128xf32, #tpu.memory_space<vmem>>, vector<1x128xf32>
      %c0_31 = arith.constant 0 : index
      %c0_32 = arith.constant 0 : index
      %54 = vector.load %arg8[%c0_31, %c0_32] : memref<1x128xf32, #tpu.memory_space<vmem>>, vector<1x128xf32>
      %cst_33 = arith.constant dense<0.000000e+00> : vector<128xf32>
      %55 = vector.multi_reduction <add>, %52, %cst_33 [0] : vector<8x128xf32> to vector<128xf32>
      %56 = vector.shape_cast %55 : vector<128xf32> to vector<1x128xf32>
      %57 = arith.mulf %52, %52 : vector<8x128xf32>
      %cst_34 = arith.constant dense<0.000000e+00> : vector<128xf32>
      %58 = vector.multi_reduction <add>, %57, %cst_34 [0] : vector<8x128xf32> to vector<128xf32>
      %59 = vector.shape_cast %58 : vector<128xf32> to vector<1x128xf32>
      %cst_35 = arith.constant 0.166666672 : f32
      %60 = vector.broadcast %cst_35 : f32 to vector<1x128xf32>
      %61 = arith.mulf %56, %60 : vector<1x128xf32>
      %cst_36 = arith.constant 0.166666672 : f32
      %62 = vector.broadcast %cst_36 : f32 to vector<1x128xf32>
      %63 = arith.mulf %59, %62 : vector<1x128xf32>
      %64 = arith.mulf %61, %61 : vector<1x128xf32>
      %65 = arith.subf %63, %64 : vector<1x128xf32>
      %cst_37 = arith.constant 0.000000e+00 : f32
      %66 = vector.broadcast %cst_37 : f32 to vector<1x128xf32>
      %67 = arith.maximumf %65, %66 : vector<1x128xf32>
      %cst_38 = arith.constant 9.99999974E-6 : f32
      %68 = vector.broadcast %cst_38 : f32 to vector<1x128xf32>
      %69 = arith.addf %67, %68 : vector<1x128xf32>
      %70 = math.rsqrt %69 : vector<1x128xf32>
      %71 = arith.mulf %53, %70 : vector<1x128xf32>
      %72 = arith.mulf %61, %71 : vector<1x128xf32>
      %73 = arith.subf %54, %72 : vector<1x128xf32>
      %74 = vector.broadcast %71 : vector<1x128xf32> to vector<8x128xf32>
      %75 = arith.mulf %52, %74 : vector<8x128xf32>
      %76 = vector.broadcast %73 : vector<1x128xf32> to vector<8x128xf32>
      %77 = arith.addf %75, %76 : vector<8x128xf32>
      %cst_39 = arith.constant 0.000000e+00 : f32
      %78 = vector.broadcast %cst_39 : f32 to vector<8x128xf32>
      %79 = arith.cmpf ogt, %77, %78 : vector<8x128xf32>
      %cst_40 = arith.constant 2.000000e-01 : f32
      %80 = vector.broadcast %cst_40 : f32 to vector<8x128xf32>
      %81 = arith.mulf %80, %77 : vector<8x128xf32>
      %82 = arith.select %79, %77, %81 : vector<8x128xi1>, vector<8x128xf32>
      %c0_41 = arith.constant 0 : index
      %c0_42 = arith.constant 0 : index
      %83 = vector.load %arg12[%c0_41, %c0_42] : memref<8x128xf32, #tpu.memory_space<vmem>>, vector<8x128xf32>
      tpu.vector_store %arg12[%c0_41, %c0_42], %82 {strides = array<i32>} : memref<8x128xf32, #tpu.memory_space<vmem>>, vector<8x128xf32>,
    } else {
    }
    %c0 = arith.constant 0 : index
    %c0_1 = arith.constant 0 : index
    %3 = vector.load %arg12[%c0, %c0_1] : memref<8x128xf32, #tpu.memory_space<vmem>>, vector<8x128xf32>
    %c0_2 = arith.constant 0 : index
    %c0_3 = arith.constant 0 : index
    %4 = vector.load %arg9[%c0_2, %c0_3] : memref<128x128xf32, #tpu.memory_space<vmem>>, vector<128x128xf32>
    %cst = arith.constant dense<0.000000e+00> : vector<8x128xf32>
    %5 = tpu.matmul %3, %4, %cst {dimension_numbers = #tpu.dot_dimension_numbers<[1], [0], [0], [1], [0, 0, 1, 1], [], []>} : vector<8x128xf32>, vector<128x128xf32>, vector<8x128xf32> -> vector<8x128xf32>
    %c0_4 = arith.constant 0 : index
    %c0_5 = arith.constant 0 : index
    %6 = vector.load %arg10[%c0_4, %c0_5] : memref<1x128xf32, #tpu.memory_space<vmem>>, vector<1x128xf32>
    %7 = vector.broadcast %6 : vector<1x128xf32> to vector<8x128xf32>
    %8 = arith.addf %5, %7 : vector<8x128xf32>
    %9 = math.tanh %8 : vector<8x128xf32>
    %c0_6 = arith.constant 0 : index
    %c0_7 = arith.constant 0 : index
    %10 = vector.load %arg11[%c0_6, %c0_7] : memref<8x128xf32, #tpu.memory_space<vmem>>, vector<8x128xf32>
    tpu.vector_store %arg11[%c0_6, %c0_7], %9 {strides = array<i32>} : memref<8x128xf32, #tpu.memory_space<vmem>>, vector<8x128xf32>,
    return
  }
  func.func @transform_0(%arg0: i32, %arg1: i32) -> (i32, i32) {
    %c0_i32 = arith.constant 0 : i32
    %c0_i32_0 = arith.constant 0 : i32
    %c0_i32_1 = arith.constant 0 : i32
    return %c0_i32, %c0_i32_0 : i32, i32
  }
  func.func @transform_1(%arg0: i32, %arg1: i32) -> (i32, i32) {
    %c0_i32 = arith.constant 0 : i32
    %c0_i32_0 = arith.constant 0 : i32
    %c0_i32_1 = arith.constant 0 : i32
    return %c0_i32, %c0_i32_0 : i32, i32
  }
  func.func @transform_2(%arg0: i32, %arg1: i32) -> (i32, i32) {
    %c0_i32 = arith.constant 0 : i32
    %c0_i32_0 = arith.constant 0 : i32
    %c0_i32_1 = arith.constant 0 : i32
    return %c0_i32, %c0_i32_0 : i32, i32
  }
  func.func @transform_3(%arg0: i32, %arg1: i32) -> (i32, i32) {
    %c0_i32 = arith.constant 0 : i32
    %c0_i32_0 = arith.constant 0 : i32
    %c0_i32_1 = arith.constant 0 : i32
    return %c0_i32, %c0_i32_0 : i32, i32
  }
  func.func @transform_4(%arg0: i32, %arg1: i32) -> (i32, i32) {
    %c0_i32 = arith.constant 0 : i32
    %c0_i32_0 = arith.constant 0 : i32
    %c0_i32_1 = arith.constant 0 : i32
    return %c0_i32, %c0_i32_0 : i32, i32
  }
  func.func @transform_5(%arg0: i32, %arg1: i32) -> (i32, i32) {
    %c0_i32 = arith.constant 0 : i32
    %c0_i32_0 = arith.constant 0 : i32
    %c0_i32_1 = arith.constant 0 : i32
    return %c0_i32, %c0_i32_0 : i32, i32
  }
  func.func @transform_6(%arg0: i32, %arg1: i32) -> (i32, i32) {
    %c0_i32 = arith.constant 0 : i32
    %c0_i32_0 = arith.constant 0 : i32
    %c0_i32_1 = arith.constant 0 : i32
    return %c0_i32, %c0_i32_0 : i32, i32
  }
  func.func @transform_7(%arg0: i32, %arg1: i32) -> (i32, i32) {
    %c1_i32 = arith.constant 1 : i32
    %0 = arith.muli %arg0, %c1_i32 : i32
    %1 = arith.addi %0, %arg1 : i32
    %c0_i32 = arith.constant 0 : i32
    %c0_i32_0 = arith.constant 0 : i32
    return %c0_i32, %1 : i32, i32
  }
  func.func @transform_8(%arg0: i32, %arg1: i32) -> (i32, i32) {
    %c1_i32 = arith.constant 1 : i32
    %0 = arith.muli %arg0, %c1_i32 : i32
    %1 = arith.addi %0, %arg1 : i32
    %c0_i32 = arith.constant 0 : i32
    %c0_i32_0 = arith.constant 0 : i32
    return %c0_i32, %1 : i32, i32
  }
  func.func @transform_9(%arg0: i32, %arg1: i32) -> (i32, i32) {
    %c1_i32 = arith.constant 1 : i32
    %0 = arith.muli %arg0, %c1_i32 : i32
    %1 = arith.addi %0, %arg1 : i32
    %c0_i32 = arith.constant 0 : i32
    %c0_i32_0 = arith.constant 0 : i32
    return %c0_i32, %1 : i32, i32
  }
}

</mosaic_0001>

<llo_original>
// kernel: tpu_custom_call.1
$region0: #{tpu_custom_call.1}
  #allocation0 [shape = 'u32[]', space=smem, size = 0x4, offset = 0x4, fixed_abs, tag = 'smem constant byte address 0x4 - core index']
  #allocation1 [shape = 'u32[144,128]{1,0:T(1,128)}', space=vmem, size = 0x12000, scoped, tag = 'internal scratch']
  %s0 = inlined_call_operand.hbm [shape: f32[8,128], index: 0, kind: input, shape index: {}]
  %s1 = inlined_call_operand.hbm [shape: f32[8,128], index: 1, kind: output, shape index: {}]
  %s2 = sld [smem:[#allocation0]]
  $region18: #{tpu_custom_call.1} parent=0
    _
  %s4 = ssub.s32 1, %s2
  %s5 = scalar_select 0, %s4, %s2
  $region1: #{tpu_custom_call.1} parent=0
    #allocation2 [shape = 'u8[4096]{0}', space=vmem, size = 0x1000, scoped, tag = 'input window, operand 0, single buffered']
    #allocation3 [shape = 's32[1]{0}', space=sflag, size = 0x4, scoped, tag = 'scoped memory for tpu_custom_call.1']
    #allocation4 [shape = 's32[1]{0}', space=sflag, size = 0x4, scoped, tag = 'scoped memory for tpu_custom_call.1']
    #allocation5 [shape = 'u8[4096]{0}', space=vmem, size = 0x1000, scoped, tag = 'output window, operand 0, single buffered']
    %6 = vsyncpa [#allocation3], 0
    %7 = vsyncpa [#allocation4], 0
    // Predicated region
    $region2: #{tpu_custom_call.1} parent=1 // pred_check
      _
    $region3: #{tpu_custom_call.1} parent=1 // pred_check_branch
      %9 = sbr.rel (0) target = $region5
    $region4: #{tpu_custom_call.1} parent=1 // pred_region
      %s11 = ssub.s32 128, 128
      %12 = vsyncadd [#allocation3], %s11
      %s14 = sshll.u32 [#allocation2], 4
      %s15 = int_to_ptr.vmem [resolvable:$true] %s14
      %17 = dma.hbm_to_vmem [thread:$0]  %s0, 128, %s15, [#allocation3]
    $region5: #{tpu_custom_call.1} parent=1 // pred_fallthru
      _
    // Predicated region
    $region6: #{tpu_custom_call.1} parent=1 // pred_check
      _
    $region7: #{tpu_custom_call.1} parent=1 // pred_check_branch
      %19 = sbr.rel (0) target = $region9
    $region8: #{tpu_custom_call.1} parent=1 // pred_region
      %20 = dma.done [#allocation3], 128
    $region9: #{tpu_custom_call.1} parent=1 // pred_fallthru
      _
    %v21 = vld [vmem:[#allocation2] sm:$0xff]
    %v22 = vmul.f32 %v21, 2.0
    %23 = vst [vmem:[#allocation5] sm:$0xff] %v22
    // Predicated region
    $region10: #{tpu_custom_call.1} parent=1 // pred_check
      _
    $region11: #{tpu_custom_call.1} parent=1 // pred_check_branch
      %25 = sbr.rel (0) target = $region13
    $region12: #{tpu_custom_call.1} parent=1 // pred_region
      %s27 = ssub.s32 128, 128
      %28 = vsyncadd [#allocation4], %s27
      %s30 = sshll.u32 [#allocation5], 4
      %s31 = int_to_ptr.vmem [resolvable:$true] %s30
      %33 = dma.vmem_to_hbm [thread:$0]  %s31, 128, %s1, [#allocation4]
    $region13: #{tpu_custom_call.1} parent=1 // pred_fallthru
      _
    // Predicated region
    $region14: #{tpu_custom_call.1} parent=1 // pred_check
      _
    $region15: #{tpu_custom_call.1} parent=1 // pred_check_branch
      %35 = sbr.rel (0) target = $region17
    $region16: #{tpu_custom_call.1} parent=1 // pred_region
      %36 = dma.done [#allocation4], 128
    $region17: #{tpu_custom_call.1} parent=1 // pred_fallthru
      _
    %37 = vsyncpa [#allocation3], 1
    %38 = vsyncpa [#allocation4], 1

// kernel: generator_forward.1
$region0: #{generator_forward.1}
  #allocation0 [shape = 'u32[]', space=smem, size = 0x4, offset = 0x4, fixed_abs, tag = 'smem constant byte address 0x4 - core index']
  #allocation1 [shape = 'u32[144,128]{1,0:T(1,128)}', space=vmem, size = 0x12000, scoped, tag = 'internal scratch']
  #allocation2 [shape = 'f32[8,128]{1,0:T(8,128)}', space=vmem, size = 0x1000, scoped, tag = 'scratch operand']
  %s0 = inlined_call_operand.vmem [shape: f32[8,256], index: 0, kind: input, shape index: {}]
  %s1 = inlined_call_operand.hbm [shape: f32[256,128], index: 1, kind: input, shape index: {}]
  %s2 = inlined_call_operand.vmem [shape: f32[1,128], index: 2, kind: input, shape index: {}]
  %s3 = inlined_call_operand.vmem [shape: f32[1,128], index: 3, kind: input, shape index: {}]
  %s4 = inlined_call_operand.hbm [shape: f32[128,128], index: 4, kind: input, shape index: {}]
  %s5 = inlined_call_operand.vmem [shape: f32[1,128], index: 5, kind: input, shape index: {}]
  %s6 = inlined_call_operand.vmem [shape: f32[1,128], index: 6, kind: input, shape index: {}]
  %s7 = inlined_call_operand.hbm [shape: f32[128,256], index: 7, kind: input, shape index: {}]
  %s8 = inlined_call_operand.vmem [shape: f32[1,256], index: 8, kind: input, shape index: {}]
  %s9 = inlined_call_operand.vmem [shape: f32[8,256], index: 9, kind: output, shape index: {}]
  %s10 = sld [smem:[#allocation0]]
  $region85: #{generator_forward.1} parent=0
    _
  %s12 = ssub.s32 1, %s10
  %s13 = scalar_select 0, %s12, %s10
  $region1: #{generator_forward.1} parent=0
    #allocation3 [shape = 'u8[131072]{0}', space=vmem, size = 0x20000, scoped, tag = 'input window, operand 1, single buffered']
    #allocation4 [shape = 's32[2]{0}', space=sflag, size = 0x8, scoped, tag = 'scoped memory for generator_forward.1']
    #allocation5 [shape = 'u8[65536]{0}', space=vmem, size = 0x10000, scoped, tag = 'input window, operand 4, single buffered']
    #allocation6 [shape = 's32[1]{0}', space=sflag, size = 0x4, scoped, tag = 'scoped memory for generator_forward.1']
    #allocation7 [shape = 'u8[131072]{0}', space=vmem, size = 0x20000, scoped, tag = 'input window, operand 7']
    %14 = vsyncpa [#allocation4], 0
    %15 = vsyncpa [#allocation6], 0
    loop: start=0, step=1, limit=4
    $region2: #{generator_forward.1} parent=1 // loop_pre_header
      _
    $region3: #{generator_forward.1} parent=1 // loop_header
      %s17 = sphi 0, %s21
      %p18 = scmp.ge.s32.totalorder %s17, 4
      %s24 = sphi 0, %s36
      %s25 = sphi 0, %s32
      %s26 = sphi 0, %s24
      %s27 = sphi 0, %s25
      %s28 = sphi 0, %s26
      %s29 = sphi 0, %s27
      %s37 = sphi 0, %s37
      %s39 = sphi 0, %s37
      %s40 = sphi 0, %s39
      %s54 = sphi 0, %s40
      %s58 = sphi 0, %s58
      %s60 = sphi 0, %s58
      %s61 = sphi 0, %s60
      %s75 = sphi 0, %s61
      %s79 = sphi 0, %s79
      %s81 = sphi 0, %s79
      %s82 = sphi 0, %s81
      %s96 = sphi 0, %s82
      %s100 = sphi 0, %s100
      %s102 = sphi 0, %s100
      %s103 = sphi 0, %s102
      %s117 = sphi 0, %s103
      %s121 = sphi 0, %s121
      %s123 = sphi 0, %s121
      %s124 = sphi 0, %s123
      %s138 = sphi 0, %s124
      %s142 = sphi 0, %s142
      %s144 = sphi 0, %s142
      %s145 = sphi 0, %s144
      %s159 = sphi 0, %s145
      %s163 = sphi 0, %s163
      %s165 = sphi 0, %s163
      %s166 = sphi 0, %s165
      %s180 = sphi 0, %s166
      %s188 = sphi 0, %s190
      %s191 = sphi 0, %s188
      %s192 = sphi 0, %s191
      %s208 = sphi 0, %s192
      %s216 = sphi 0, %s218
      %s219 = sphi 0, %s216
      %s220 = sphi 0, %s219
      %s236 = sphi 0, %s220
      %s244 = sphi 0, %s246
      %s247 = sphi 0, %s244
      %s248 = sphi 0, %s247
      %s264 = sphi 0, %s248
    $region4: #{generator_forward.1} parent=1 // loop_header_branch
      %20 = sbr.rel (%p18) target = $region8
    $region5: #{generator_forward.1} parent=1 // loop_body
      %s22 = ssub.s32 %s17, 1
      %s23 = ssub.s32 %s17, 2
      %s30 = sadd.s32 1, %s25
      %p31 = scmp.ge.s32.totalorder %s30, 1
      %s32 = scalar_select %p31, 0, %s30
      %s33 = sadd.s32 1, %s24
      %s34 = scalar_select %p31, %s33, %s24
      %p35 = scmp.ge.s32.totalorder %s34, 2
      %s36 = scalar_select %p35, 0, %s34
      %s38 = sadd.s32 %s37, 1
      %p41 = scmp.eq.s32.totalorder %s17, 1
      %p42 = scmp.ne.s32.totalorder %s37, %s39
      %p43 = scmp.eq.s32.totalorder %s17, 0
      %p44 = por %p42, %p43
      %p45 = scmp.ne.s32.totalorder %s37, %s39
      %p46 = scmp.eq.s32.totalorder %s22, 1
      %p47 = por %p45, %p46
      %p48 = scmp.ne.s32.totalorder %s39, %s40
      %p49 = scmp.eq.s32.totalorder %s22, 0
      %p50 = por %p48, %p49
      %p51 = scmp.ne.s32.totalorder %s39, %s40
      %p52 = scmp.eq.s32.totalorder %s23, 1
      %p53 = por %p51, %p52
      %p55 = scmp.ne.s32.totalorder %s40, %s54
      %p56 = scmp.eq.s32.totalorder %s23, 0
      %p57 = por %p55, %p56
      %s59 = sadd.s32 %s58, 1
      %p62 = scmp.eq.s32.totalorder %s17, 1
      %p63 = scmp.ne.s32.totalorder %s58, %s60
      %p64 = scmp.eq.s32.totalorder %s17, 0
      %p65 = por %p63, %p64
      %p66 = scmp.ne.s32.totalorder %s58, %s60
      %p67 = scmp.eq.s32.totalorder %s22, 1
      %p68 = por %p66, %p67
      %p69 = scmp.ne.s32.totalorder %s60, %s61
      %p70 = scmp.eq.s32.totalorder %s22, 0
      %p71 = por %p69, %p70
      %p72 = scmp.ne.s32.totalorder %s60, %s61
      %p73 = scmp.eq.s32.totalorder %s23, 1
      %p74 = por %p72, %p73
      %p76 = scmp.ne.s32.totalorder %s61, %s75
      %p77 = scmp.eq.s32.totalorder %s23, 0
      %p78 = por %p76, %p77
      %s80 = sadd.s32 %s79, 1
      %p83 = scmp.eq.s32.totalorder %s17, 1
      %p84 = scmp.ne.s32.totalorder %s79, %s81
      %p85 = scmp.eq.s32.totalorder %s17, 0
      %p86 = por %p84, %p85
      %p87 = scmp.ne.s32.totalorder %s79, %s81
      %p88 = scmp.eq.s32.totalorder %s22, 1
      %p89 = por %p87, %p88
      %p90 = scmp.ne.s32.totalorder %s81, %s82
      %p91 = scmp.eq.s32.totalorder %s22, 0
      %p92 = por %p90, %p91
      %p93 = scmp.ne.s32.totalorder %s81, %s82
      %p94 = scmp.eq.s32.totalorder %s23, 1
      %p95 = por %p93, %p94
      %p97 = scmp.ne.s32.totalorder %s82, %s96
      %p98 = scmp.eq.s32.totalorder %s23, 0
      %p99 = por %p97, %p98
      %s101 = sadd.s32 %s100, 1
      %p104 = scmp.eq.s32.totalorder %s17, 1
      %p105 = scmp.ne.s32.totalorder %s100, %s102
      %p106 = scmp.eq.s32.totalorder %s17, 0
      %p107 = por %p105, %p106
      %p108 = scmp.ne.s32.totalorder %s100, %s102
      %p109 = scmp.eq.s32.totalorder %s22, 1
      %p110 = por %p108, %p109
      %p111 = scmp.ne.s32.totalorder %s102, %s103
      %p112 = scmp.eq.s32.totalorder %s22, 0
      %p113 = por %p111, %p112
      %p114 = scmp.ne.s32.totalorder %s102, %s103
      %p115 = scmp.eq.s32.totalorder %s23, 1
      %p116 = por %p114, %p115
      %p118 = scmp.ne.s32.totalorder %s103, %s117
      %p119 = scmp.eq.s32.totalorder %s23, 0
      %p120 = por %p118, %p119
      %s122 = sadd.s32 %s121, 1
      %p125 = scmp.eq.s32.totalorder %s17, 1
      %p126 = scmp.ne.s32.totalorder %s121, %s123
      %p127 = scmp.eq.s32.totalorder %s17, 0
      %p128 = por %p126, %p127
      %p129 = scmp.ne.s32.totalorder %s121, %s123
      %p130 = scmp.eq.s32.totalorder %s22, 1
      %p131 = por %p129, %p130
      %p132 = scmp.ne.s32.totalorder %s123, %s124
      %p133 = scmp.eq.s32.totalorder %s22, 0
      %p134 = por %p132, %p133
      %p135 = scmp.ne.s32.totalorder %s123, %s124
      %p136 = scmp.eq.s32.totalorder %s23, 1
      %p137 = por %p135, %p136
      %p139 = scmp.ne.s32.totalorder %s124, %s138
      %p140 = scmp.eq.s32.totalorder %s23, 0
      %p141 = por %p139, %p140
      %s143 = sadd.s32 %s142, 1
      %p146 = scmp.eq.s32.totalorder %s17, 1
      %p147 = scmp.ne.s32.totalorder %s142, %s144
      %p148 = scmp.eq.s32.totalorder %s17, 0
      %p149 = por %p147, %p148
      %p150 = scmp.ne.s32.totalorder %s142, %s144
      %p151 = scmp.eq.s32.totalorder %s22, 1
      %p152 = por %p150, %p151
      %p153 = scmp.ne.s32.totalorder %s144, %s145
      %p154 = scmp.eq.s32.totalorder %s22, 0
      %p155 = por %p153, %p154
      %p156 = scmp.ne.s32.totalorder %s144, %s145
      %p157 = scmp.eq.s32.totalorder %s23, 1
      %p158 = por %p156, %p157
      %p160 = scmp.ne.s32.totalorder %s145, %s159
      %p161 = scmp.eq.s32.totalorder %s23, 0
      %p162 = por %p160, %p161
      %s164 = sadd.s32 %s163, 1
      %p167 = scmp.eq.s32.totalorder %s17, 1
      %p168 = scmp.ne.s32.totalorder %s163, %s165
      %p169 = scmp.eq.s32.totalorder %s17, 0
      %p170 = por %p168, %p169
      %p171 = scmp.ne.s32.totalorder %s163, %s165
      %p172 = scmp.eq.s32.totalorder %s22, 1
      %p173 = por %p171, %p172
      %p174 = scmp.ne.s32.totalorder %s165, %s166
      %p175 = scmp.eq.s32.totalorder %s22, 0
      %p176 = por %p174, %p175
      %p177 = scmp.ne.s32.totalorder %s165, %s166
      %p178 = scmp.eq.s32.totalorder %s23, 1
      %p179 = por %p177, %p178
      %p181 = scmp.ne.s32.totalorder %s166, %s180
      %p182 = scmp.eq.s32.totalorder %s23, 0
      %p183 = por %p181, %p182
      %s184 = sadd.s32 %s24, %s25
      %s185 = sadd.s32 %s36, %s32
      %s186 = ssub.s32 %s184, %s185
      %p187 = scmp.eq.s32.totalorder %s186, 0
      %s189 = sadd.s32 %s188, 1
      %s190 = scalar_select %p187, %s188, %s189
      %p193 = pneg %p187
      %p194 = scmp.eq.s32.totalorder %s17, 1
      %p195 = por %p193, %p194
      %p196 = scmp.ne.s32.totalorder %s188, %s191
      %p197 = scmp.eq.s32.totalorder %s17, 0
      %p198 = por %p196, %p197
      %p199 = scmp.ne.s32.totalorder %s188, %s191
      %p200 = scmp.eq.s32.totalorder %s22, 1
      %p201 = por %p199, %p200
      %p202 = scmp.ne.s32.totalorder %s191, %s192
      %p203 = scmp.eq.s32.totalorder %s22, 0
      %p204 = por %p202, %p203
      %p205 = scmp.ne.s32.totalorder %s191, %s192
      %p206 = scmp.eq.s32.totalorder %s23, 1
      %p207 = por %p205, %p206
      %p209 = scmp.ne.s32.totalorder %s192, %s208
      %p210 = scmp.eq.s32.totalorder %s23, 0
      %p211 = por %p209, %p210
      %s212 = sadd.s32 %s24, %s25
      %s213 = sadd.s32 %s36, %s32
      %s214 = ssub.s32 %s212, %s213
      %p215 = scmp.eq.s32.totalorder %s214, 0
      %s217 = sadd.s32 %s216, 1
      %s218 = scalar_select %p215, %s216, %s217
      %p221 = pneg %p215
      %p222 = scmp.eq.s32.totalorder %s17, 1
      %p223 = por %p221, %p222
      %p224 = scmp.ne.s32.totalorder %s216, %s219
      %p225 = scmp.eq.s32.totalorder %s17, 0
      %p226 = por %p224, %p225
      %p227 = scmp.ne.s32.totalorder %s216, %s219
      %p228 = scmp.eq.s32.totalorder %s22, 1
      %p229 = por %p227, %p228
      %p230 = scmp.ne.s32.totalorder %s219, %s220
      %p231 = scmp.eq.s32.totalorder %s22, 0
      %p232 = por %p230, %p231
      %p233 = scmp.ne.s32.totalorder %s219, %s220
      %p234 = scmp.eq.s32.totalorder %s23, 1
      %p235 = por %p233, %p234
      %p237 = scmp.ne.s32.totalorder %s220, %s236
      %p238 = scmp.eq.s32.totalorder %s23, 0
      %p239 = por %p237, %p238
      %s240 = sadd.s32 %s24, %s25
      %s241 = sadd.s32 %s36, %s32
      %s242 = ssub.s32 %s240, %s241
      %p243 = scmp.eq.s32.totalorder %s242, 0
      %s245 = sadd.s32 %s244, 1
      %s246 = scalar_select %p243, %s244, %s245
      %p249 = pneg %p243
      %p250 = scmp.eq.s32.totalorder %s17, 1
      %p251 = por %p249, %p250
      %p252 = scmp.ne.s32.totalorder %s244, %s247
      %p253 = scmp.eq.s32.totalorder %s17, 0
      %p254 = por %p252, %p253
      %p255 = scmp.ne.s32.totalorder %s244, %s247
      %p256 = scmp.eq.s32.totalorder %s22, 1
      %p257 = por %p255, %p256
      %p258 = scmp.ne.s32.totalorder %s247, %s248
      %p259 = scmp.eq.s32.totalorder %s22, 0
      %p260 = por %p258, %p259
      %p261 = scmp.ne.s32.totalorder %s247, %s248
      %p262 = scmp.eq.s32.totalorder %s23, 1
      %p263 = por %p261, %p262
      %p265 = scmp.ne.s32.totalorder %s248, %s264
      %p266 = scmp.eq.s32.totalorder %s23, 0
      %p267 = por %p265, %p266
      %p268 = scmp.le.s32.totalorder 1, %s17
      %p269 = scmp.lt.s32.totalorder %s17, 3
      %p270 = pnand %p268, %p269
      %p271 = pneg %p270
      // Predicated region
      $region9: #{generator_forward.1} parent=5 // pred_check
        _
      $region10: #{generator_forward.1} parent=5 // pred_check_branch
        %273 = sbr.rel (%p270) target = $region12
      $region11: #{generator_forward.1} parent=5 // pred_region
        %s274 = ssub.s32 %s17, 1
        // Predicated region
        $region13: #{generator_forward.1} parent=11 // pred_check
          %p275 = pneg %p50
        $region14: #{generator_forward.1} parent=11 // pred_check_branch
          %277 = sbr.rel (%p275) target = $region16
        $region15: #{generator_forward.1} parent=11 // pred_region
          _
        $region16: #{generator_forward.1} parent=11 // pred_fallthru
          _
        // Predicated region
        $region17: #{generator_forward.1} parent=11 // pred_check
          %p278 = pneg %p71
        $region18: #{generator_forward.1} parent=11 // pred_check_branch
          %280 = sbr.rel (%p278) target = $region20
        $region19: #{generator_forward.1} parent=11 // pred_region
          %s282 = ssub.s32 4096, 4096
          %283 = vsyncadd [#allocation4], %s282
          %s284 = sshll.u32 [#allocation3], 4
          %s285 = int_to_ptr.vmem [resolvable:$true] %s284
          %290 = dma.hbm_to_vmem [thread:$0]  %s1, 4096, %s285, [#allocation4], 128, 128, 8
        $region20: #{generator_forward.1} parent=11 // pred_fallthru
          _
        // Predicated region
        $region21: #{generator_forward.1} parent=11 // pred_check
          %p291 = pneg %p92
        $region22: #{generator_forward.1} parent=11 // pred_check_branch
          %293 = sbr.rel (%p291) target = $region24
        $region23: #{generator_forward.1} parent=11 // pred_region
          _
        $region24: #{generator_forward.1} parent=11 // pred_fallthru
          _
        // Predicated region
        $region25: #{generator_forward.1} parent=11 // pred_check
          %p294 = pneg %p113
        $region26: #{generator_forward.1} parent=11 // pred_check_branch
          %296 = sbr.rel (%p294) target = $region28
        $region27: #{generator_forward.1} parent=11 // pred_region
          _
        $region28: #{generator_forward.1} parent=11 // pred_fallthru
          _
        // Predicated region
        $region29: #{generator_forward.1} parent=11 // pred_check
          %p297 = pneg %p134
        $region30: #{generator_forward.1} parent=11 // pred_check_branch
          %299 = sbr.rel (%p297) target = $region32
        $region31: #{generator_forward.1} parent=11 // pred_region
          %s301 = ssub.s32 2048, 2048
          %302 = vsyncadd [#allocation6], %s301
          %s303 = sshll.u32 [#allocation5], 4
          %s304 = int_to_ptr.vmem [resolvable:$true] %s303
          %309 = dma.hbm_to_vmem [thread:$0]  %s4, 2048, %s304, [#allocation6], 128, 128, 8
        $region32: #{generator_forward.1} parent=11 // pred_fallthru
          _
        // Predicated region
        $region33: #{generator_forward.1} parent=11 // pred_check
          %p310 = pneg %p155
        $region34: #{generator_forward.1} parent=11 // pred_check_branch
          %312 = sbr.rel (%p310) target = $region36
        $region35: #{generator_forward.1} parent=11 // pred_region
          _
        $region36: #{generator_forward.1} parent=11 // pred_fallthru
          _
        // Predicated region
        $region37: #{generator_forward.1} parent=11 // pred_check
          %p313 = pneg %p176
        $region38: #{generator_forward.1} parent=11 // pred_check_branch
          %315 = sbr.rel (%p313) target = $region40
        $region39: #{generator_forward.1} parent=11 // pred_region
          _
        $region40: #{generator_forward.1} parent=11 // pred_fallthru
          _
      $region12: #{generator_forward.1} parent=5 // pred_fallthru
        _
      %p316 = scmp.lt.s32.totalorder %s17, 2
      // Predicated region
      $region41: #{generator_forward.1} parent=5 // pred_check
        %p317 = pneg %p316
      $region42: #{generator_forward.1} parent=5 // pred_check_branch
        %319 = sbr.rel (%p317) target = $region44
      $region43: #{generator_forward.1} parent=5 // pred_region
        // Predicated region
        $region45: #{generator_forward.1} parent=43 // pred_check
          %p320 = pneg %p198
        $region46: #{generator_forward.1} parent=43 // pred_check_branch
          %322 = sbr.rel (%p320) target = $region48
        $region47: #{generator_forward.1} parent=43 // pred_region
          %s323 = sand.u32 %s17, 1
          %s324 = scalar_lea.sflag [#allocation4], %s323
          %s325 = sand.u32 %s188, 1
          %s326 = smul.addr %s325, 128
          %s327 = scalar_lea.vmem [#allocation7], %s326
          %s328 = sadd.s32 %s24, %s25
          %s330 = ssub.s32 2048, 2048
          %331 = vsyncadd %s324, %s330
          %s332 = smul.addr %s328, 128
          %s333 = scalar_lea.hbm %s7, %s332
          %s334 = sshll.u32 %s327, 4
          %s335 = int_to_ptr.vmem [resolvable:$true] %s334
          %340 = dma.hbm_to_vmem [thread:$0]  %s333, 2048, %s335, %s324, 256, 128, 8
        $region48: #{generator_forward.1} parent=43 // pred_fallthru
          _
        // Predicated region
        $region49: #{generator_forward.1} parent=43 // pred_check
          %p341 = pneg %p226
        $region50: #{generator_forward.1} parent=43 // pred_check_branch
          %343 = sbr.rel (%p341) target = $region52
        $region51: #{generator_forward.1} parent=43 // pred_region
          %s344 = sadd.s32 %s24, %s25
          %p345 = scmp.lt.s32.totalorder %s344, 1
          %s346 = scalar_select %p345, %s344, 1
          %s347 = scalar_lea.vmem %s8, %s346
          %s348 = sadd.s32 %s24, %s25
        $region52: #{generator_forward.1} parent=43 // pred_fallthru
          _
      $region44: #{generator_forward.1} parent=5 // pred_fallthru
        _
      %p349 = scmp.le.s32.totalorder 1, %s17
      %p350 = scmp.lt.s32.totalorder %s17, 3
      %p351 = pnand %p349, %p350
      %p352 = pneg %p351
      // Predicated region
      $region53: #{generator_forward.1} parent=5 // pred_check
        _
      $region54: #{generator_forward.1} parent=5 // pred_check_branch
        %354 = sbr.rel (%p351) target = $region56
      $region55: #{generator_forward.1} parent=5 // pred_region
        %s355 = ssub.s32 %s17, 1
        // Predicated region
        $region57: #{generator_forward.1} parent=55 // pred_check
          %p356 = pneg %p71
        $region58: #{generator_forward.1} parent=55 // pred_check_branch
          %358 = sbr.rel (%p356) target = $region60
        $region59: #{generator_forward.1} parent=55 // pred_region
          %359 = dma.done [#allocation4], 4096
        $region60: #{generator_forward.1} parent=55 // pred_fallthru
          _
        // Predicated region
        $region61: #{generator_forward.1} parent=55 // pred_check
          %p360 = pneg %p134
        $region62: #{generator_forward.1} parent=55 // pred_check_branch
          %362 = sbr.rel (%p360) target = $region64
        $region63: #{generator_forward.1} parent=55 // pred_region
          %363 = dma.done [#allocation6], 2048
        $region64: #{generator_forward.1} parent=55 // pred_fallthru
          _
        %s364 = sand.u32 %s22, 1
        %s365 = scalar_lea.sflag [#allocation4], %s364
        %s366 = sand.u32 %s191, 1
        %s367 = smul.addr %s366, 128
        %s368 = scalar_lea.vmem [#allocation7], %s367
        // Predicated region
        $region65: #{generator_forward.1} parent=55 // pred_check
          %p369 = pneg %p204
        $region66: #{generator_forward.1} parent=55 // pred_check_branch
          %371 = sbr.rel (%p369) target = $region68
        $region67: #{generator_forward.1} parent=55 // pred_region
          %372 = dma.done %s365, 2048
        $region68: #{generator_forward.1} parent=55 // pred_fallthru
          _
        %p373 = pneg %p50
        %p374 = pneg %p47
        %p375 = pneg %p71
        %p376 = pneg %p68
        %p377 = pneg %p92
        %p378 = pneg %p89
        %p379 = pneg %p113
        %p380 = pneg %p110
        %p381 = pneg %p134
        %p382 = pneg %p131
        %p383 = pneg %p155
        %p384 = pneg %p152
        %p385 = pneg %p176
        %p386 = pneg %p173
        %s387 = sand.u32 %s22, 1
        %s388 = scalar_lea.sflag [#allocation4], %s387
        %s389 = sand.u32 %s191, 1
        %s390 = smul.addr %s389, 128
        %s391 = scalar_lea.vmem [#allocation7], %s390
        %p392 = pneg %p204
        %p393 = pneg %p201
        %s394 = sadd.s32 %s26, %s27
        %p395 = scmp.lt.s32.totalorder %s394, 1
        %s396 = scalar_select %p395, %s394, 1
        %s397 = scalar_lea.vmem %s8, %s396
        %p398 = pneg %p232
        %p399 = pneg %p229
        %p400 = pneg %p260
        %p401 = pneg %p257
        %s402 = sadd.s32 %s26, %s27
        %p403 = scmp.lt.s32.totalorder %s402, 1
        %s404 = scalar_select %p403, %s402, 1
        %s405 = smul.addr %s404, 8
        %s406 = scalar_lea.vmem %s9, %s405
        %s407 = sadd.s32 %s26, %s27
        %s408 = sadd.s32 %s26, %s27
        %p409 = scmp.lt.s32.totalorder %s408, 1
        %s410 = scalar_select %p409, %s408, 1
        %s411 = scalar_lea.vmem %s8, %s410
        %s412 = sadd.s32 %s26, %s27
        %s413 = sadd.s32 %s26, %s27
        %p414 = scmp.lt.s32.totalorder %s413, 1
        %s415 = scalar_select %p414, %s413, 1
        %s416 = smul.addr %s415, 8
        %s417 = scalar_lea.vmem %s9, %s416
        %s418 = sadd.s32 %s26, %s27
        %p419 = scmp.eq.s32.totalorder %s27, 0
        // Predicated region
        $region69: #{generator_forward.1} parent=55 // pred_check
          %p420 = pneg %p419
        $region70: #{generator_forward.1} parent=55 // pred_check_branch
          %422 = sbr.rel (%p420) target = $region72
        $region71: #{generator_forward.1} parent=55 // pred_region
          %v423 = vld [vmem:[%s0] sm:$0xff]
          %v424 = vld [vmem:[%s0 + $0x8] sm:$0xff]
          %v425 = vld [vmem:[#allocation3] sm:$0xff]
          %v426 = vld [vmem:[#allocation3 + $0x8] sm:$0xff]
          %v427 = vld [vmem:[#allocation3 + $0x10] sm:$0xff]
          %v428 = vld [vmem:[#allocation3 + $0x18] sm:$0xff]
          %v429 = vld [vmem:[#allocation3 + $0x20] sm:$0xff]
          %v430 = vld [vmem:[#allocation3 + $0x28] sm:$0xff]
          %v431 = vld [vmem:[#allocation3 + $0x30] sm:$0xff]
          %v432 = vld [vmem:[#allocation3 + $0x38] sm:$0xff]
          %v433 = vld [vmem:[#allocation3 + $0x40] sm:$0xff]
          %v434 = vld [vmem:[#allocation3 + $0x48] sm:$0xff]
          %v435 = vld [vmem:[#allocation3 + $0x50] sm:$0xff]
          %v436 = vld [vmem:[#allocation3 + $0x58] sm:$0xff]
          %v437 = vld [vmem:[#allocation3 + $0x60] sm:$0xff]
          %v438 = vld [vmem:[#allocation3 + $0x68] sm:$0xff]
          %v439 = vld [vmem:[#allocation3 + $0x70] sm:$0xff]
          %v440 = vld [vmem:[#allocation3 + $0x78] sm:$0xff]
          %v441 = vld [vmem:[#allocation3 + $0x80] sm:$0xff]
          %v442 = vld [vmem:[#allocation3 + $0x88] sm:$0xff]
          %v443 = vld [vmem:[#allocation3 + $0x90] sm:$0xff]
          %v444 = vld [vmem:[#allocation3 + $0x98] sm:$0xff]
          %v445 = vld [vmem:[#allocation3 + $0xa0] sm:$0xff]
          %v446 = vld [vmem:[#allocation3 + $0xa8] sm:$0xff]
          %v447 = vld [vmem:[#allocation3 + $0xb0] sm:$0xff]
          %v448 = vld [vmem:[#allocation3 + $0xb8] sm:$0xff]
          %v449 = vld [vmem:[#allocation3 + $0xc0] sm:$0xff]
          %v450 = vld [vmem:[#allocation3 + $0xc8] sm:$0xff]
          %v451 = vld [vmem:[#allocation3 + $0xd0] sm:$0xff]
          %v452 = vld [vmem:[#allocation3 + $0xd8] sm:$0xff]
          %v453 = vld [vmem:[#allocation3 + $0xe0] sm:$0xff]
          %v454 = vld [vmem:[#allocation3 + $0xe8] sm:$0xff]
          %v455 = vld [vmem:[#allocation3 + $0xf0] sm:$0xff]
          %v456 = vld [vmem:[#allocation3 + $0xf8] sm:$0xff]
          %457 = vmatprep.subr.mxu0 0.0
          %458 = vmatpush1.msra.mxu0 %v425
          %459 = vmatprep.subr.mxu0 0.0
          %460 = vmatpush1.msra.mxu0 %v426
          %461 = vmatprep.subr.mxu0 0.0
          %462 = vmatpush1.msra.mxu0 %v427
          %463 = vmatprep.subr.mxu0 0.0
          %464 = vmatpush1.msra.mxu0 %v428
          %465 = vmatprep.subr.mxu0 0.0
          %466 = vmatpush1.msra.mxu0 %v429
          %467 = vmatprep.subr.mxu0 0.0
          %468 = vmatpush1.msra.mxu0 %v430
          %469 = vmatprep.subr.mxu0 0.0
          %470 = vmatpush1.msra.mxu0 %v431
          %471 = vmatprep.subr.mxu0 0.0
          %472 = vmatpush1.msra.mxu0 %v432
          %473 = vmatprep.subr.mxu0 0.0
          %474 = vmatpush1.msra.mxu0 %v433
          %475 = vmatprep.subr.mxu0 0.0
          %476 = vmatpush1.msra.mxu0 %v434
          %477 = vmatprep.subr.mxu0 0.0
          %478 = vmatpush1.msra.mxu0 %v435
          %479 = vmatprep.subr.mxu0 0.0
          %480 = vmatpush1.msra.mxu0 %v436
          %481 = vmatprep.subr.mxu0 0.0
          %482 = vmatpush1.msra.mxu0 %v437
          %483 = vmatprep.subr.mxu0 0.0
          %484 = vmatpush1.msra.mxu0 %v438
          %485 = vmatprep.subr.mxu0 0.0
          %486 = vmatpush1.msra.mxu0 %v439
          %487 = vmatprep.subr.mxu0 0.0
          %488 = vmatpush1.msra.mxu0 %v440
          %489 = vmatprep.subr.mxu0 0.0
          %490 = vmatpush1.msra.mxu0 %v441
          %491 = vmatprep.subr.mxu0 0.0
          %492 = vmatpush1.msra.mxu0 %v442
          %493 = vmatprep.subr.mxu0 0.0
          %494 = vmatpush1.msra.mxu0 %v443
          %495 = vmatprep.subr.mxu0 0.0
          %496 = vmatpush1.msra.mxu0 %v444
          %497 = vmatprep.subr.mxu0 0.0
          %498 = vmatpush1.msra.mxu0 %v445
          %499 = vmatprep.subr.mxu0 0.0
          %500 = vmatpush1.msra.mxu0 %v446
          %501 = vmatprep.subr.mxu0 0.0
          %502 = vmatpush1.msra.mxu0 %v447
          %503 = vmatprep.subr.mxu0 0.0
          %504 = vmatpush1.msra.mxu0 %v448
          %505 = vmatprep.subr.mxu0 0.0
          %506 = vmatpush1.msra.mxu0 %v449
          %507 = vmatprep.subr.mxu0 0.0
          %508 = vmatpush1.msra.mxu0 %v450
          %509 = vmatprep.subr.mxu0 0.0
          %510 = vmatpush1.msra.mxu0 %v451
          %511 = vmatprep.subr.mxu0 0.0
          %512 = vmatpush1.msra.mxu0 %v452
          %513 = vmatprep.subr.mxu0 0.0
          %514 = vmatpush1.msra.mxu0 %v453
          %515 = vmatprep.subr.mxu0 0.0
          %516 = vmatpush1.msra.mxu0 %v454
          %517 = vmatprep.subr.mxu0 0.0
          %518 = vmatpush1.msra.mxu0 %v455
          %519 = vmatprep.subr.mxu0 0.0
          %520 = vmatpush1.msra.mxu0 %v456
          %521 = vmatprep.mubr.f32.mxu0 %v424
          %522 = vmatmul.mubr.f32.gmra.mrb[0].mxu0 %v423
          %v523 = vpop.f32.mrb[0].mxu0
          %v524 = vadd.f32 0.0, %v523
          %v525 = vpop.f32.mrb[0].mxu0
          %526 = vdwg.mxu0
          %v527 = vld [vmem:[%s2] sm:$0x1]
          %v528 = vld [vmem:[%s3] sm:$0x1]
          %v529 = vrot.slane %v524, 4
          %v530 = vadd.f32 %v524, %v529
          %v531 = vrot.slane %v530, 2
          %v532 = vadd.f32 %v530, %v531
          %v533 = vrot.slane %v532, 1
          %v534 = vadd.f32 %v532, %v533
          %v535 = vmul.f32 %v524, %v524
          %v536 = vrot.slane %v535, 4
          %v537 = vadd.f32 %v535, %v536
          %v538 = vrot.slane %v537, 2
          %v539 = vadd.f32 %v537, %v538
          %v540 = vrot.slane %v539, 1
          %v541 = vadd.f32 %v539, %v540
          %v542 = vmul.f32 %v534, 0.16666667
          %v543 = vmul.f32 %v541, 0.16666667
          %v544 = vmul.f32 %v542, %v542
          %v545 = vsub.f32 %v543, %v544
          %v546 = vmax.f32 %v545, 0.0
          %v547 = vadd.f32 %v546, 1e-05
          %v548 = vrsqrt.pop %v547
          %v549 = vmul.f32 %v527, %v548
          %v550 = vmul.f32 %v542, %v549
          %v551 = vsub.f32 %v528, %v550
          %v553 = vlaneseq
          %v554 = vshrl.u32 %v553, 7
          %v555 = vsub.s32 0, %v554
          %v556 = vrot.slane %v549, %v555
          %v558 = vmul.f32 %v524, %v556
          %v560 = vlaneseq
          %v561 = vshrl.u32 %v560, 7
          %v562 = vsub.s32 0, %v561
          %v563 = vrot.slane %v551, %v562
          %v565 = vadd.f32 %v558, %v563
          %vm566 = vcmp.gt.f32.partialorder %v565, 0.0
          %v567 = vmul.f32 %v565, 0.2
          %v568 = vsel %vm566, %v565, %v567
          %v569 = vlaneseq
          %v570 = vshrl.u32 %v569, 7
          %vm571 = vcmp.lt.s32.totalorder %v570, 6
          %v572 = vsel %vm571, 1, 0
          %vm573 = vcmp.eq.s32.totalorder %v572, 1
          %v574 = vsel %vm573, %v568, 0.0
          %v575 = vld [vmem:[#allocation5] sm:$0xff]
          %v576 = vld [vmem:[#allocation5 + $0x8] sm:$0xff]
          %v577 = vld [vmem:[#allocation5 + $0x10] sm:$0xff]
          %v578 = vld [vmem:[#allocation5 + $0x18] sm:$0xff]
          %v579 = vld [vmem:[#allocation5 + $0x20] sm:$0xff]
          %v580 = vld [vmem:[#allocation5 + $0x28] sm:$0xff]
          %v581 = vld [vmem:[#allocation5 + $0x30] sm:$0xff]
          %v582 = vld [vmem:[#allocation5 + $0x38] sm:$0xff]
          %v583 = vld [vmem:[#allocation5 + $0x40] sm:$0xff]
          %v584 = vld [vmem:[#allocation5 + $0x48] sm:$0xff]
          %v585 = vld [vmem:[#allocation5 + $0x50] sm:$0xff]
          %v586 = vld [vmem:[#allocation5 + $0x58] sm:$0xff]
          %v587 = vld [vmem:[#allocation5 + $0x60] sm:$0xff]
          %v588 = vld [vmem:[#allocation5 + $0x68] sm:$0xff]
          %v589 = vld [vmem:[#allocation5 + $0x70] sm:$0xff]
          %v590 = vld [vmem:[#allocation5 + $0x78] sm:$0xff]
          %591 = vmatprep.subr.mxu0 0.0
          %592 = vmatpush1.msra.mxu0 %v575
          %593 = vmatprep.subr.mxu0 0.0
          %594 = vmatpush1.msra.mxu0 %v576
          %595 = vmatprep.subr.mxu0 0.0
          %596 = vmatpush1.msra.mxu0 %v577
          %597 = vmatprep.subr.mxu0 0.0
          %598 = vmatpush1.msra.mxu0 %v578
          %599 = vmatprep.subr.mxu0 0.0
          %600 = vmatpush1.msra.mxu0 %v579
          %601 = vmatprep.subr.mxu0 0.0
          %602 = vmatpush1.msra.mxu0 %v580
          %603 = vmatprep.subr.mxu0 0.0
          %604 = vmatpush1.msra.mxu0 %v581
          %605 = vmatprep.subr.mxu0 0.0
          %606 = vmatpush1.msra.mxu0 %v582
          %607 = vmatprep.subr.mxu0 0.0
          %608 = vmatpush1.msra.mxu0 %v583
          %609 = vmatprep.subr.mxu0 0.0
          %610 = vmatpush1.msra.mxu0 %v584
          %611 = vmatprep.subr.mxu0 0.0
          %612 = vmatpush1.msra.mxu0 %v585
          %613 = vmatprep.subr.mxu0 0.0
          %614 = vmatpush1.msra.mxu0 %v586
          %615 = vmatprep.subr.mxu0 0.0
          %616 = vmatpush1.msra.mxu0 %v587
          %617 = vmatprep.subr.mxu0 0.0
          %618 = vmatpush1.msra.mxu0 %v588
          %619 = vmatprep.subr.mxu0 0.0
          %620 = vmatpush1.msra.mxu0 %v589
          %621 = vmatprep.subr.mxu0 0.0
          %622 = vmatpush1.msra.mxu0 %v590
          %623 = vmatprep.subr.mxu0 0.0
          %624 = vmatpush1.msra.mxu0 0.0
          %625 = vmatprep.subr.mxu0 0.0
          %626 = vmatpush1.msra.mxu0 0.0
          %627 = vmatprep.subr.mxu0 0.0
          %628 = vmatpush1.msra.mxu0 0.0
          %629 = vmatprep.subr.mxu0 0.0
          %630 = vmatpush1.msra.mxu0 0.0
          %631 = vmatprep.subr.mxu0 0.0
          %632 = vmatpush1.msra.mxu0 0.0
          %633 = vmatprep.subr.mxu0 0.0
          %634 = vmatpush1.msra.mxu0 0.0
          %635 = vmatprep.subr.mxu0 0.0
          %636 = vmatpush1.msra.mxu0 0.0
          %637 = vmatprep.subr.mxu0 0.0
          %638 = vmatpush1.msra.mxu0 0.0
          %639 = vmatprep.subr.mxu0 0.0
          %640 = vmatpush1.msra.mxu0 0.0
          %641 = vmatprep.subr.mxu0 0.0
          %642 = vmatpush1.msra.mxu0 0.0
          %643 = vmatprep.subr.mxu0 0.0
          %644 = vmatpush1.msra.mxu0 0.0
          %645 = vmatprep.subr.mxu0 0.0
          %646 = vmatpush1.msra.mxu0 0.0
          %647 = vmatprep.subr.mxu0 0.0
          %648 = vmatpush1.msra.mxu0 0.0
          %649 = vmatprep.subr.mxu0 0.0
          %650 = vmatpush1.msra.mxu0 0.0
          %651 = vmatprep.subr.mxu0 0.0
          %652 = vmatpush1.msra.mxu0 0.0
          %653 = vmatprep.subr.mxu0 0.0
          %654 = vmatpush1.msra.mxu0 0.0
          %655 = vmatprep.mubr.f32.mxu0 0.0
          %656 = vmatmul.mubr.f32.gmra.mrb[0].mxu0 %v574
          %v657 = vpop.f32.mrb[0].mxu0
          %v658 = vadd.f32 0.0, %v657
          %v659 = vpop.f32.mrb[0].mxu0
          %660 = vdwg.mxu0
          %v661 = vld [vmem:[%s5] sm:$0x1]
          %v662 = vld [vmem:[%s6] sm:$0x1]
          %v663 = vrot.slane %v658, 4
          %v664 = vadd.f32 %v658, %v663
          %v665 = vrot.slane %v664, 2
          %v666 = vadd.f32 %v664, %v665
          %v667 = vrot.slane %v666, 1
          %v668 = vadd.f32 %v666, %v667
          %v669 = vmul.f32 %v658, %v658
          %v670 = vrot.slane %v669, 4
          %v671 = vadd.f32 %v669, %v670
          %v672 = vrot.slane %v671, 2
          %v673 = vadd.f32 %v671, %v672
          %v674 = vrot.slane %v673, 1
          %v675 = vadd.f32 %v673, %v674
          %v676 = vmul.f32 %v668, 0.16666667
          %v677 = vmul.f32 %v675, 0.16666667
          %v678 = vmul.f32 %v676, %v676
          %v679 = vsub.f32 %v677, %v678
          %v680 = vmax.f32 %v679, 0.0
          %v681 = vadd.f32 %v680, 1e-05
          %v682 = vrsqrt.pop %v681
          %v683 = vmul.f32 %v661, %v682
          %v684 = vmul.f32 %v676, %v683
          %v685 = vsub.f32 %v662, %v684
          %v687 = vlaneseq
          %v688 = vshrl.u32 %v687, 7
          %v689 = vsub.s32 0, %v688
          %v690 = vrot.slane %v683, %v689
          %v692 = vmul.f32 %v658, %v690
          %v694 = vlaneseq
          %v695 = vshrl.u32 %v694, 7
          %v696 = vsub.s32 0, %v695
          %v697 = vrot.slane %v685, %v696
          %v699 = vadd.f32 %v692, %v697
          %vm700 = vcmp.gt.f32.partialorder %v699, 0.0
          %v701 = vmul.f32 %v699, 0.2
          %v702 = vsel %vm700, %v699, %v701
          %703 = vst [vmem:[#allocation2] sm:$0xff] %v702
        $region72: #{generator_forward.1} parent=55 // pred_fallthru
          _
        %v704 = vld [vmem:[#allocation2] sm:$0xff]
        %v705 = vld [vmem:[%s368] sm:$0xff]
        %v706 = vld [vmem:[%s368 + $0x8] sm:$0xff]
        %v707 = vld [vmem:[%s368 + $0x10] sm:$0xff]
        %v708 = vld [vmem:[%s368 + $0x18] sm:$0xff]
        %v709 = vld [vmem:[%s368 + $0x20] sm:$0xff]
        %v710 = vld [vmem:[%s368 + $0x28] sm:$0xff]
        %v711 = vld [vmem:[%s368 + $0x30] sm:$0xff]
        %v712 = vld [vmem:[%s368 + $0x38] sm:$0xff]
        %v713 = vld [vmem:[%s368 + $0x40] sm:$0xff]
        %v714 = vld [vmem:[%s368 + $0x48] sm:$0xff]
        %v715 = vld [vmem:[%s368 + $0x50] sm:$0xff]
        %v716 = vld [vmem:[%s368 + $0x58] sm:$0xff]
        %v717 = vld [vmem:[%s368 + $0x60] sm:$0xff]
        %v718 = vld [vmem:[%s368 + $0x68] sm:$0xff]
        %v719 = vld [vmem:[%s368 + $0x70] sm:$0xff]
        %v720 = vld [vmem:[%s368 + $0x78] sm:$0xff]
        %v721 = vld [vmem:[%s411] sm:$0x1]
        %v723 = vlaneseq
        %v724 = vshrl.u32 %v723, 7
        %v725 = vsub.s32 0, %v724
        %v726 = vrot.slane %v721, %v725
        %728 = vmatprep.subr.mxu0 0.0
        %729 = vmatpush1.msra.mxu0 %v705
        %730 = vmatprep.subr.mxu0 0.0
        %731 = vmatpush1.msra.mxu0 %v706
        %732 = vmatprep.subr.mxu0 0.0
        %733 = vmatpush1.msra.mxu0 %v707
        %734 = vmatprep.subr.mxu0 0.0
        %735 = vmatpush1.msra.mxu0 %v708
        %736 = vmatprep.subr.mxu0 0.0
        %737 = vmatpush1.msra.mxu0 %v709
        %738 = vmatprep.subr.mxu0 0.0
        %739 = vmatpush1.msra.mxu0 %v710
        %740 = vmatprep.subr.mxu0 0.0
        %741 = vmatpush1.msra.mxu0 %v711
        %742 = vmatprep.subr.mxu0 0.0
        %743 = vmatpush1.msra.mxu0 %v712
        %744 = vmatprep.subr.mxu0 0.0
        %745 = vmatpush1.msra.mxu0 %v713
        %746 = vmatprep.subr.mxu0 0.0
        %747 = vmatpush1.msra.mxu0 %v714
        %748 = vmatprep.subr.mxu0 0.0
        %749 = vmatpush1.msra.mxu0 %v715
        %750 = vmatprep.subr.mxu0 0.0
        %751 = vmatpush1.msra.mxu0 %v716
        %752 = vmatprep.subr.mxu0 0.0
        %753 = vmatpush1.msra.mxu0 %v717
        %754 = vmatprep.subr.mxu0 0.0
        %755 = vmatpush1.msra.mxu0 %v718
        %756 = vmatprep.subr.mxu0 0.0
        %757 = vmatpush1.msra.mxu0 %v719
        %758 = vmatprep.subr.mxu0 0.0
        %759 = vmatpush1.msra.mxu0 %v720
        %760 = vmatprep.subr.mxu0 0.0
        %761 = vmatpush1.msra.mxu0 0.0
        %762 = vmatprep.subr.mxu0 0.0
        %763 = vmatpush1.msra.mxu0 0.0
        %764 = vmatprep.subr.mxu0 0.0
        %765 = vmatpush1.msra.mxu0 0.0
        %766 = vmatprep.subr.mxu0 0.0
        %767 = vmatpush1.msra.mxu0 0.0
        %768 = vmatprep.subr.mxu0 0.0
        %769 = vmatpush1.msra.mxu0 0.0
        %770 = vmatprep.subr.mxu0 0.0
        %771 = vmatpush1.msra.mxu0 0.0
        %772 = vmatprep.subr.mxu0 0.0
        %773 = vmatpush1.msra.mxu0 0.0
        %774 = vmatprep.subr.mxu0 0.0
        %775 = vmatpush1.msra.mxu0 0.0
        %776 = vmatprep.subr.mxu0 0.0
        %777 = vmatpush1.msra.mxu0 0.0
        %778 = vmatprep.subr.mxu0 0.0
        %779 = vmatpush1.msra.mxu0 0.0
        %780 = vmatprep.subr.mxu0 0.0
        %781 = vmatpush1.msra.mxu0 0.0
        %782 = vmatprep.subr.mxu0 0.0
        %783 = vmatpush1.msra.mxu0 0.0
        %784 = vmatprep.subr.mxu0 0.0
        %785 = vmatpush1.msra.mxu0 0.0
        %786 = vmatprep.subr.mxu0 0.0
        %787 = vmatpush1.msra.mxu0 0.0
        %788 = vmatprep.subr.mxu0 0.0
        %789 = vmatpush1.msra.mxu0 0.0
        %790 = vmatprep.subr.mxu0 0.0
        %791 = vmatpush1.msra.mxu0 0.0
        %792 = vmatprep.mubr.f32.mxu0 0.0
        %793 = vmatmul.mubr.f32.gmra.mrb[0].mxu0 %v704
        %v794 = vpop.f32.mrb[0].mxu0
        %v795 = vadd.f32 %v726, %v794
        %v796 = vpop.f32.mrb[0].mxu0
        %797 = vdwg.mxu0
        %v798 = vtanh.pop %v795
        %799 = vst [vmem:[%s417] sm:$0xff] %v798
        %s800 = sadd.s32 %s26, %s27
        %p801 = scmp.lt.s32.totalorder %s800, 1
        %s802 = scalar_select %p801, %s800, 1
        %s803 = smul.addr %s802, 8
        %s804 = scalar_lea.vmem %s9, %s803
        // Predicated region
        $region73: #{generator_forward.1} parent=55 // pred_check
          %p805 = pneg %p257
        $region74: #{generator_forward.1} parent=55 // pred_check_branch
          %807 = sbr.rel (%p805) target = $region76
        $region75: #{generator_forward.1} parent=55 // pred_region
          %s808 = sadd.s32 %s26, %s27
        $region76: #{generator_forward.1} parent=55 // pred_fallthru
          _
      $region56: #{generator_forward.1} parent=5 // pred_fallthru
        _
      %p809 = scmp.le.s32.totalorder 2, %s17
      // Predicated region
      $region77: #{generator_forward.1} parent=5 // pred_check
        %p810 = pneg %p809
      $region78: #{generator_forward.1} parent=5 // pred_check_branch
        %812 = sbr.rel (%p810) target = $region80
      $region79: #{generator_forward.1} parent=5 // pred_region
        %s813 = ssub.s32 %s17, 2
        // Predicated region
        $region81: #{generator_forward.1} parent=79 // pred_check
          %p814 = pneg %p263
        $region82: #{generator_forward.1} parent=79 // pred_check_branch
          %816 = sbr.rel (%p814) target = $region84
        $region83: #{generator_forward.1} parent=79 // pred_region
          %s817 = sadd.s32 %s28, %s29
          %p818 = scmp.lt.s32.totalorder %s817, 1
          %s819 = scalar_select %p818, %s817, 1
          %s820 = smul.addr %s819, 8
          %s821 = scalar_lea.vmem %s9, %s820
        $region84: #{generator_forward.1} parent=79 // pred_fallthru
          _
      $region80: #{generator_forward.1} parent=5 // pred_fallthru
        _
    $region6: #{generator_forward.1} parent=1 // loop_footer
      %s21 = sadd.s32 1, %s17
    $region7: #{generator_forward.1} parent=1 // loop_footer_branch
      %16 = sbr.rel target = $region3
    $region8: #{generator_forward.1} parent=1 // loop_exit
      _
    %822 = vsyncpa [#allocation4], 1
    %s823 = scalar_lea.sflag [#allocation4], 1
    %824 = vsyncpa %s823, 1
    %825 = vsyncpa [#allocation6], 1

</llo_original>
